<compile_context>
chip_gen: v7x
topology: tpu7x:2x2x1
jax: 0.10.0
libtpu: 0.0.40
codegen_flags: <defaults>
</compile_context>

<pallas_src>
import functools

import jax
import jax.numpy as jnp
from jax import lax
from jax.experimental import pallas as pl
from jax.experimental.pallas import tpu as pltpu


def _simlearner_kernel(x_ref, w_ref, b_ref, o_ref, *, batch, nodes):
    x = x_ref[...]                       # (B*N, K) f32
    w = w_ref[...]                       # (K, H)   f32
    bias = b_ref[...]                    # (1, H)   f32

    # fc over the whole stacked batch: (B*N, K) @ (K, H) + b  (single MXU pass)
    h = jnp.dot(x, w, preferred_element_type=jnp.float32) + bias

    # Inverse L2 norms: rsqrt(max(||h||^2, eps^2)) == 1 / max(||h||, eps).
    # Independent of the gram matmuls below -> XLU reduce + EUP rsqrt overlap
    # with the MXU work instead of sitting on the critical path.
    r = lax.rsqrt(jnp.maximum(jnp.sum(h * h, axis=-1, keepdims=True),
                              jnp.float32(1e-24)))           # (B*N, 1)

    # mean over batch of per-batch cosine-similarity matrices.
    acc = jnp.zeros((nodes, nodes), jnp.float32)
    for b in range(batch):                                    # static (B=2)
        lo = b * nodes
        hb = h[lo:lo + nodes, :]          # sublane-aligned row slice (free)
        rb = r[lo:lo + nodes, :]          # (N, 1)
        # Raw gram, contracting over H for both operands (no explicit h^T).
        gb = lax.dot_general(hb, hb,
                             dimension_numbers=(((1,), (1,)), ((), ())),
                             preferred_element_type=jnp.float32)   # (N, N)
        # Outer product of inverse norms via a K=1 contraction (avoids an
        # explicit (N,1)->(1,N) transpose).
        sb = lax.dot_general(rb, rb,
                             dimension_numbers=(((1,), (1,)), ((), ())),
                             preferred_element_type=jnp.float32)   # (N, N)
        acc = acc + gb * sb               # diag(r) g diag(r), on the tiny tile
    o_ref[...] = acc * jnp.float32(1.0 / batch)


@jax.jit
def simlearner_forward(x, w, b):
    """x: (B, N, T, D) f32; w: (K, H); b: (H,). Returns (N, N) f32."""
    B, N, T, D = x.shape
    K = T * D
    H = w.shape[1]

    # Glue reshapes stay in plain JAX (row-major, zero-copy views for XLA).
    x2d = x.reshape(B * N, K)
    b2d = b.reshape(1, H)

    kernel = functools.partial(_simlearner_kernel, batch=B, nodes=N)

    flops = 2 * B * N * K * H + 2 * B * N * N * H + 4 * B * N * N
    bytes_accessed = 4 * (B * N * K + K * H + H + N * N)

    return pl.pallas_call(
        kernel,
        out_shape=jax.ShapeDtypeStruct((N, N), jnp.float32),
        # No grid: single invocation, whole-array blocks resident in VMEM.
        in_specs=[
            pl.BlockSpec(memory_space=pltpu.MemorySpace.VMEM),  # x (stacked)
            pl.BlockSpec(memory_space=pltpu.MemorySpace.VMEM),  # fc weight
            pl.BlockSpec(memory_space=pltpu.MemorySpace.VMEM),  # fc bias
        ],
        out_specs=pl.BlockSpec(memory_space=pltpu.MemorySpace.VMEM),
        cost_estimate=pl.CostEstimate(
            flops=flops,
            transcendentals=B * N,
            bytes_accessed=bytes_accessed,
        ),
    )(x2d, w, b2d)


def _reference_forward(x, w, b):
    B, N, T, D = x.shape
    xf = x.reshape(B, N, T * D)
    h = xf @ w + b
    h = h / jnp.maximum(
        jnp.sqrt(jnp.sum(h * h, axis=-1, keepdims=True)), 1e-12)
    sim = jnp.einsum("bnh,bmh->bnm", h, h)
    return jnp.mean(sim, axis=0)


if __name__ == "__main__":
    # cfg: input_size=4, window_size=20, horizon=4 -> K = 4*16 = 64
    #      graph.hidden_dim = 32, nodes N = 8, batch B = 2
    B, N, T, D = 2, 8, 16, 4
    K, H = T * D, 32

    key = jax.random.PRNGKey(0)
    kx, kw, kb = jax.random.split(key, 3)

    x = jax.random.normal(kx, (B, N, T, D), dtype=jnp.float32)
    # Deterministic nn.Linear-style init: U(-1/sqrt(K), 1/sqrt(K))
    bound = 1.0 / jnp.sqrt(jnp.float32(K))
    w = jax.random.uniform(kw, (K, H), jnp.float32, -bound, bound)
    b = jax.random.uniform(kb, (H,), jnp.float32, -bound, bound)

    out = simlearner_forward(x, w, b)
    out = jax.block_until_ready(out)

    ref = _reference_forward(x, w, b)
    assert out.shape == (N, N)
    assert jnp.allclose(out, ref, atol=1e-5, rtol=1e-5)

    # TODO(synk): gumbel_softmax / random_graph branches need in-kernel random
    # sampling (F.gumbel_softmax / randn); intentionally not fused here since
    # the chosen config disables them.
    print("KERNEL_OK")
</pallas_src>

<mosaic_0001>
module attributes {stable_mosaic.version = 11 : i64} {
  func.func @_simlearner_kernel(%arg0: memref<16x64xf32, #tpu.memory_space<vmem>>, %arg1: memref<64x32xf32, #tpu.memory_space<vmem>>, %arg2: memref<1x32xf32, #tpu.memory_space<vmem>>, %arg3: memref<8x8xf32, #tpu.memory_space<vmem>>) attributes {dimension_semantics = [], scalar_prefetch = 0 : i64, scratch_operands = 0 : i64, tpu.core_type = #tpu.core_type<tc>} {
    %c0 = arith.constant 0 : index
    %c0_0 = arith.constant 0 : index
    %0 = vector.load %arg0[%c0, %c0_0] : memref<16x64xf32, #tpu.memory_space<vmem>>, vector<16x64xf32>
    %c0_1 = arith.constant 0 : index
    %c0_2 = arith.constant 0 : index
    %1 = vector.load %arg1[%c0_1, %c0_2] : memref<64x32xf32, #tpu.memory_space<vmem>>, vector<64x32xf32>
    %c0_3 = arith.constant 0 : index
    %c0_4 = arith.constant 0 : index
    %2 = vector.load %arg2[%c0_3, %c0_4] : memref<1x32xf32, #tpu.memory_space<vmem>>, vector<1x32xf32>
    %cst = arith.constant dense<0.000000e+00> : vector<16x32xf32>
    %3 = tpu.matmul %0, %1, %cst {dimension_numbers = #tpu.dot_dimension_numbers<[1], [0], [0], [1], [0, 0, 1, 1], [], []>} : vector<16x64xf32>, vector<64x32xf32>, vector<16x32xf32> -> vector<16x32xf32>
    %4 = vector.broadcast %2 : vector<1x32xf32> to vector<16x32xf32>
    %5 = arith.addf %3, %4 : vector<16x32xf32>
    %6 = arith.mulf %5, %5 : vector<16x32xf32>
    %cst_5 = arith.constant dense<0.000000e+00> : vector<16xf32>
    %7 = vector.multi_reduction <add>, %6, %cst_5 [1] : vector<16x32xf32> to vector<16xf32>
    %8 = vector.shape_cast %7 : vector<16xf32> to vector<16x1xf32>
    %cst_6 = arith.constant 1.000000e-24 : f32
    %9 = vector.broadcast %cst_6 : f32 to vector<16x1xf32>
    %10 = arith.maximumf %8, %9 : vector<16x1xf32>
    %11 = math.rsqrt %10 : vector<16x1xf32>
    %cst_7 = arith.constant 0.000000e+00 : f32
    %12 = vector.broadcast %cst_7 : f32 to vector<8x8xf32>
    %13 = vector.extract_strided_slice %5 {offsets = [0, 0], sizes = [8, 32], strides = [1, 1]} : vector<16x32xf32> to vector<8x32xf32>
    %14 = vector.extract_strided_slice %11 {offsets = [0, 0], sizes = [8, 1], strides = [1, 1]} : vector<16x1xf32> to vector<8x1xf32>
    %cst_8 = arith.constant dense<0.000000e+00> : vector<8x8xf32>
    %15 = tpu.matmul %13, %13, %cst_8 {dimension_numbers = #tpu.dot_dimension_numbers<[1], [1], [0], [0], [0, 0, 1, 0], [], []>} : vector<8x32xf32>, vector<8x32xf32>, vector<8x8xf32> -> vector<8x8xf32>
    %cst_9 = arith.constant dense<0.000000e+00> : vector<8x8xf32>
    %16 = tpu.matmul %14, %14, %cst_9 {dimension_numbers = #tpu.dot_dimension_numbers<[1], [1], [0], [0], [0, 0, 1, 0], [], []>} : vector<8x1xf32>, vector<8x1xf32>, vector<8x8xf32> -> vector<8x8xf32>
    %17 = arith.mulf %15, %16 : vector<8x8xf32>
    %18 = arith.addf %12, %17 : vector<8x8xf32>
    %19 = vector.extract_strided_slice %5 {offsets = [8, 0], sizes = [8, 32], strides = [1, 1]} : vector<16x32xf32> to vector<8x32xf32>
    %20 = vector.extract_strided_slice %11 {offsets = [8, 0], sizes = [8, 1], strides = [1, 1]} : vector<16x1xf32> to vector<8x1xf32>
    %cst_10 = arith.constant dense<0.000000e+00> : vector<8x8xf32>
    %21 = tpu.matmul %19, %19, %cst_10 {dimension_numbers = #tpu.dot_dimension_numbers<[1], [1], [0], [0], [0, 0, 1, 0], [], []>} : vector<8x32xf32>, vector<8x32xf32>, vector<8x8xf32> -> vector<8x8xf32>
    %cst_11 = arith.constant dense<0.000000e+00> : vector<8x8xf32>
    %22 = tpu.matmul %20, %20, %cst_11 {dimension_numbers = #tpu.dot_dimension_numbers<[1], [1], [0], [0], [0, 0, 1, 0], [], []>} : vector<8x1xf32>, vector<8x1xf32>, vector<8x8xf32> -> vector<8x8xf32>
    %23 = arith.mulf %21, %22 : vector<8x8xf32>
    %24 = arith.addf %18, %23 : vector<8x8xf32>
    %cst_12 = arith.constant 5.000000e-01 : f32
    %25 = vector.broadcast %cst_12 : f32 to vector<8x8xf32>
    %26 = arith.mulf %24, %25 : vector<8x8xf32>
    %c0_13 = arith.constant 0 : index
    %c0_14 = arith.constant 0 : index
    %27 = vector.load %arg3[%c0_13, %c0_14] : memref<8x8xf32, #tpu.memory_space<vmem>>, vector<8x8xf32>
    tpu.vector_store %arg3[%c0_13, %c0_14], %26 {strides = array<i32>} : memref<8x8xf32, #tpu.memory_space<vmem>>, vector<8x8xf32>,
    return
  }
}

</mosaic_0001>

<llo_original>
// kernel: simlearner_forward.1
$region0: #{simlearner_forward.1}
  #allocation0 [shape = 'u32[]', space=smem, size = 0x4, offset = 0x4, fixed_abs, tag = 'smem constant byte address 0x4 - core index']
  #allocation1 [shape = 'u32[144,128]{1,0:T(1,128)}', space=vmem, size = 0x12000, scoped, tag = 'internal scratch']
  %s0 = inlined_call_operand.vmem [shape: f32[16,64], index: 0, kind: input, shape index: {}]
  %s1 = inlined_call_operand.vmem [shape: f32[64,32], index: 1, kind: input, shape index: {}]
  %s2 = inlined_call_operand.vmem [shape: f32[1,32], index: 2, kind: input, shape index: {}]
  %s3 = inlined_call_operand.hbm [shape: f32[8,8], index: 3, kind: output, shape index: {}]
  %s4 = sld [smem:[#allocation0]]
  $region22: #{simlearner_forward.1} parent=0
    _
  %s6 = ssub.s32 1, %s4
  %s7 = scalar_select 0, %s6, %s4
  $region1: #{simlearner_forward.1} parent=0
    #allocation2 [shape = 'u8[4096]{0}', space=vmem, size = 0x1000, scoped, tag = 'output window, operand 0, single buffered']
    #allocation3 [shape = 's32[1]{0}', space=sflag, size = 0x4, scoped, tag = 'scoped memory for simlearner_forward.1']
    %8 = vsyncpa [#allocation3], 0
    // Predicated region
    $region2: #{simlearner_forward.1} parent=1 // pred_check
      _
    $region3: #{simlearner_forward.1} parent=1 // pred_check_branch
      %10 = sbr.rel (0) target = $region5
    $region4: #{simlearner_forward.1} parent=1 // pred_region
      _
    $region5: #{simlearner_forward.1} parent=1 // pred_fallthru
      _
    // Predicated region
    $region6: #{simlearner_forward.1} parent=1 // pred_check
      _
    $region7: #{simlearner_forward.1} parent=1 // pred_check_branch
      %12 = sbr.rel (0) target = $region9
    $region8: #{simlearner_forward.1} parent=1 // pred_region
      _
    $region9: #{simlearner_forward.1} parent=1 // pred_fallthru
      _
    // Predicated region
    $region10: #{simlearner_forward.1} parent=1 // pred_check
      _
    $region11: #{simlearner_forward.1} parent=1 // pred_check_branch
      %14 = sbr.rel (0) target = $region13
    $region12: #{simlearner_forward.1} parent=1 // pred_region
      _
    $region13: #{simlearner_forward.1} parent=1 // pred_fallthru
      _
    %v15 = vld [vmem:[%s0] sm:$0xff]
    %v16 = vld [vmem:[%s0 + $0x8] sm:$0xff]
    %v17 = vld [vmem:[%s1] sm:$0xff]
    %v18 = vld [vmem:[%s1 + $0x8] sm:$0xff]
    %v19 = vld [vmem:[%s1 + $0x10] sm:$0xff]
    %v20 = vld [vmem:[%s1 + $0x18] sm:$0xff]
    %v21 = vld [vmem:[%s1 + $0x20] sm:$0xff]
    %v22 = vld [vmem:[%s1 + $0x28] sm:$0xff]
    %v23 = vld [vmem:[%s1 + $0x30] sm:$0xff]
    %v24 = vld [vmem:[%s1 + $0x38] sm:$0xff]
    %v25 = vld [vmem:[%s2] sm:$0x1]
    %v27 = vlaneseq
    %v28 = vshrl.u32 %v27, 7
    %v29 = vsub.s32 0, %v28
    %v30 = vrot.slane %v25, %v29
    %vm32 = vcmask 523264
    %v34 = vsel %vm32, %v15, 0
    %v37 = vsel %vm32, %v16, 0
    %39 = vmatprep.subr.mxu0 0.0
    %40 = vmatpush1.msra.mxu0 %v17
    %41 = vmatprep.subr.mxu0 0.0
    %42 = vmatpush1.msra.mxu0 %v18
    %43 = vmatprep.subr.mxu0 0.0
    %44 = vmatpush1.msra.mxu0 %v19
    %45 = vmatprep.subr.mxu0 0.0
    %46 = vmatpush1.msra.mxu0 %v20
    %47 = vmatprep.subr.mxu0 0.0
    %48 = vmatpush1.msra.mxu0 %v21
    %49 = vmatprep.subr.mxu0 0.0
    %50 = vmatpush1.msra.mxu0 %v22
    %51 = vmatprep.subr.mxu0 0.0
    %52 = vmatpush1.msra.mxu0 %v23
    %53 = vmatprep.subr.mxu0 0.0
    %54 = vmatpush1.msra.mxu0 %v24
    %55 = vmatprep.subr.mxu0 0.0
    %56 = vmatpush1.msra.mxu0 0.0
    %57 = vmatprep.subr.mxu0 0.0
    %58 = vmatpush1.msra.mxu0 0.0
    %59 = vmatprep.subr.mxu0 0.0
    %60 = vmatpush1.msra.mxu0 0.0
    %61 = vmatprep.subr.mxu0 0.0
    %62 = vmatpush1.msra.mxu0 0.0
    %63 = vmatprep.subr.mxu0 0.0
    %64 = vmatpush1.msra.mxu0 0.0
    %65 = vmatprep.subr.mxu0 0.0
    %66 = vmatpush1.msra.mxu0 0.0
    %67 = vmatprep.subr.mxu0 0.0
    %68 = vmatpush1.msra.mxu0 0.0
    %69 = vmatprep.subr.mxu0 0.0
    %70 = vmatpush1.msra.mxu0 0.0
    %71 = vmatprep.subr.mxu0 0.0
    %72 = vmatpush1.msra.mxu0 0.0
    %73 = vmatprep.subr.mxu0 0.0
    %74 = vmatpush1.msra.mxu0 0.0
    %75 = vmatprep.subr.mxu0 0.0
    %76 = vmatpush1.msra.mxu0 0.0
    %77 = vmatprep.subr.mxu0 0.0
    %78 = vmatpush1.msra.mxu0 0.0
    %79 = vmatprep.subr.mxu0 0.0
    %80 = vmatpush1.msra.mxu0 0.0
    %81 = vmatprep.subr.mxu0 0.0
    %82 = vmatpush1.msra.mxu0 0.0
    %83 = vmatprep.subr.mxu0 0.0
    %84 = vmatpush1.msra.mxu0 0.0
    %85 = vmatprep.subr.mxu0 0.0
    %86 = vmatpush1.msra.mxu0 0.0
    %87 = vmatprep.subr.mxu0 0.0
    %88 = vmatpush1.msra.mxu0 0.0
    %89 = vmatprep.subr.mxu0 0.0
    %90 = vmatpush1.msra.mxu0 0.0
    %91 = vmatprep.subr.mxu0 0.0
    %92 = vmatpush1.msra.mxu0 0.0
    %93 = vmatprep.subr.mxu0 0.0
    %94 = vmatpush1.msra.mxu0 0.0
    %95 = vmatprep.subr.mxu0 0.0
    %96 = vmatpush1.msra.mxu0 0.0
    %97 = vmatprep.subr.mxu0 0.0
    %98 = vmatpush1.msra.mxu0 0.0
    %99 = vmatprep.subr.mxu0 0.0
    %100 = vmatpush1.msra.mxu0 0.0
    %101 = vmatprep.subr.mxu0 0.0
    %102 = vmatpush1.msra.mxu0 0.0
    %103 = vmatprep.mubr.f32.mxu0 0.0
    %104 = vmatmul.mubr.f32.gmra.mrb[0].mxu0 %v34
    %v105 = vpop.f32.mrb[0].mxu0
    %v106 = vadd.f32 %v30, %v105
    %v107 = vpop.f32.mrb[0].mxu0
    %108 = vmatprep.mubr.f32.mxu0 0.0
    %109 = vmatmul.mubr.f32.gmra.mrb[0].mxu0 %v37
    %v110 = vpop.f32.mrb[0].mxu0
    %v111 = vadd.f32 %v30, %v110
    %v112 = vpop.f32.mrb[0].mxu0
    %113 = vdwg.mxu0
    %v114 = vmul.f32 %v106, %v106
    %v115 = vmul.f32 %v111, %v111
    %vm116 = vcmask 261120
    %v117 = vsel %vm116, %v114, 0.0
    %118 = vadd.xlane.f32.xlu0 %v117
    %v119 = vpop.xlane.xlu0 %118
    %v120 = vsel %vm116, %v115, 0.0
    %121 = vadd.xlane.f32.xlu0 %v120
    %v122 = vpop.xlane.xlu0 %121
    %v123 = vmax.f32 %v119, 1e-24
    %v124 = vmax.f32 %v122, 1e-24
    %v125 = vrsqrt.pop %v123
    %v126 = vrsqrt.pop %v124
    %v128 = vsel %vm116, %v106, 0
    %130 = vmatprep.subr.mxu0 0.0
    %131 = vmatpush1.xpose.msra.mxu0 %v128
    %132 = vmatprep.subr.mxu0 0.0
    %133 = vmatpush1.xpose.msra.mxu0 0.0
    %134 = vmatprep.subr.mxu0 0.0
    %135 = vmatpush1.xpose.msra.mxu0 0.0
    %136 = vmatprep.subr.mxu0 0.0
    %137 = vmatpush1.xpose.msra.mxu0 0.0
    %138 = vmatprep.subr.mxu0 0.0
    %139 = vmatpush1.xpose.msra.mxu0 0.0
    %140 = vmatprep.subr.mxu0 0.0
    %141 = vmatpush1.xpose.msra.mxu0 0.0
    %142 = vmatprep.subr.mxu0 0.0
    %143 = vmatpush1.xpose.msra.mxu0 0.0
    %144 = vmatprep.subr.mxu0 0.0
    %145 = vmatpush1.xpose.msra.mxu0 0.0
    %146 = vmatprep.subr.mxu0 0.0
    %147 = vmatpush1.xpose.msra.mxu0 0.0
    %148 = vmatprep.subr.mxu0 0.0
    %149 = vmatpush1.xpose.msra.mxu0 0.0
    %150 = vmatprep.subr.mxu0 0.0
    %151 = vmatpush1.xpose.msra.mxu0 0.0
    %152 = vmatprep.subr.mxu0 0.0
    %153 = vmatpush1.xpose.msra.mxu0 0.0
    %154 = vmatprep.subr.mxu0 0.0
    %155 = vmatpush1.xpose.msra.mxu0 0.0
    %156 = vmatprep.subr.mxu0 0.0
    %157 = vmatpush1.xpose.msra.mxu0 0.0
    %158 = vmatprep.subr.mxu0 0.0
    %159 = vmatpush1.xpose.msra.mxu0 0.0
    %160 = vmatprep.subr.mxu0 0.0
    %161 = vmatpush1.xpose.msra.mxu0 0.0
    %162 = vmatprep.subr.mxu0 0.0
    %163 = vmatpush1.xpose.msra.mxu0 0.0
    %164 = vmatprep.subr.mxu0 0.0
    %165 = vmatpush1.xpose.msra.mxu0 0.0
    %166 = vmatprep.subr.mxu0 0.0
    %167 = vmatpush1.xpose.msra.mxu0 0.0
    %168 = vmatprep.subr.mxu0 0.0
    %169 = vmatpush1.xpose.msra.mxu0 0.0
    %170 = vmatprep.subr.mxu0 0.0
    %171 = vmatpush1.xpose.msra.mxu0 0.0
    %172 = vmatprep.subr.mxu0 0.0
    %173 = vmatpush1.xpose.msra.mxu0 0.0
    %174 = vmatprep.subr.mxu0 0.0
    %175 = vmatpush1.xpose.msra.mxu0 0.0
    %176 = vmatprep.subr.mxu0 0.0
    %177 = vmatpush1.xpose.msra.mxu0 0.0
    %178 = vmatprep.subr.mxu0 0.0
    %179 = vmatpush1.xpose.msra.mxu0 0.0
    %180 = vmatprep.subr.mxu0 0.0
    %181 = vmatpush1.xpose.msra.mxu0 0.0
    %182 = vmatprep.subr.mxu0 0.0
    %183 = vmatpush1.xpose.msra.mxu0 0.0
    %184 = vmatprep.subr.mxu0 0.0
    %185 = vmatpush1.xpose.msra.mxu0 0.0
    %186 = vmatprep.subr.mxu0 0.0
    %187 = vmatpush1.xpose.msra.mxu0 0.0
    %188 = vmatprep.subr.mxu0 0.0
    %189 = vmatpush1.xpose.msra.mxu0 0.0
    %190 = vmatprep.subr.mxu0 0.0
    %191 = vmatpush1.xpose.msra.mxu0 0.0
    %192 = vmatprep.subr.mxu0 0.0
    %193 = vmatpush1.xpose.msra.mxu0 0.0
    %194 = vmatprep.mubr.f32.mxu0 0.0
    %195 = vmatmul.mubr.f32.gmra.mrb[0].mxu0 %v128
    %v196 = vpop.f32.mrb[0].mxu0
    %v197 = vadd.f32 0.0, %v196
    %v198 = vpop.f32.mrb[0].mxu0
    %199 = vdwg.mxu0
    %vm200 = vcmask 7168
    %v202 = vsel %vm200, %v125, 0
    %204 = vmatprep.subr.mxu0 0.0
    %205 = vmatpush1.xpose.msra.mxu0 %v202
    %206 = vmatprep.subr.mxu0 0.0
    %207 = vmatpush1.xpose.msra.mxu0 0.0
    %208 = vmatprep.subr.mxu0 0.0
    %209 = vmatpush1.xpose.msra.mxu0 0.0
    %210 = vmatprep.subr.mxu0 0.0
    %211 = vmatpush1.xpose.msra.mxu0 0.0
    %212 = vmatprep.subr.mxu0 0.0
    %213 = vmatpush1.xpose.msra.mxu0 0.0
    %214 = vmatprep.subr.mxu0 0.0
    %215 = vmatpush1.xpose.msra.mxu0 0.0
    %216 = vmatprep.subr.mxu0 0.0
    %217 = vmatpush1.xpose.msra.mxu0 0.0
    %218 = vmatprep.subr.mxu0 0.0
    %219 = vmatpush1.xpose.msra.mxu0 0.0
    %220 = vmatprep.subr.mxu0 0.0
    %221 = vmatpush1.xpose.msra.mxu0 0.0
    %222 = vmatprep.subr.mxu0 0.0
    %223 = vmatpush1.xpose.msra.mxu0 0.0
    %224 = vmatprep.subr.mxu0 0.0
    %225 = vmatpush1.xpose.msra.mxu0 0.0
    %226 = vmatprep.subr.mxu0 0.0
    %227 = vmatpush1.xpose.msra.mxu0 0.0
    %228 = vmatprep.subr.mxu0 0.0
    %229 = vmatpush1.xpose.msra.mxu0 0.0
    %230 = vmatprep.subr.mxu0 0.0
    %231 = vmatpush1.xpose.msra.mxu0 0.0
    %232 = vmatprep.subr.mxu0 0.0
    %233 = vmatpush1.xpose.msra.mxu0 0.0
    %234 = vmatprep.subr.mxu0 0.0
    %235 = vmatpush1.xpose.msra.mxu0 0.0
    %236 = vmatprep.subr.mxu0 0.0
    %237 = vmatpush1.xpose.msra.mxu0 0.0
    %238 = vmatprep.subr.mxu0 0.0
    %239 = vmatpush1.xpose.msra.mxu0 0.0
    %240 = vmatprep.subr.mxu0 0.0
    %241 = vmatpush1.xpose.msra.mxu0 0.0
    %242 = vmatprep.subr.mxu0 0.0
    %243 = vmatpush1.xpose.msra.mxu0 0.0
    %244 = vmatprep.subr.mxu0 0.0
    %245 = vmatpush1.xpose.msra.mxu0 0.0
    %246 = vmatprep.subr.mxu0 0.0
    %247 = vmatpush1.xpose.msra.mxu0 0.0
    %248 = vmatprep.subr.mxu0 0.0
    %249 = vmatpush1.xpose.msra.mxu0 0.0
    %250 = vmatprep.subr.mxu0 0.0
    %251 = vmatpush1.xpose.msra.mxu0 0.0
    %252 = vmatprep.subr.mxu0 0.0
    %253 = vmatpush1.xpose.msra.mxu0 0.0
    %254 = vmatprep.subr.mxu0 0.0
    %255 = vmatpush1.xpose.msra.mxu0 0.0
    %256 = vmatprep.subr.mxu0 0.0
    %257 = vmatpush1.xpose.msra.mxu0 0.0
    %258 = vmatprep.subr.mxu0 0.0
    %259 = vmatpush1.xpose.msra.mxu0 0.0
    %260 = vmatprep.subr.mxu0 0.0
    %261 = vmatpush1.xpose.msra.mxu0 0.0
    %262 = vmatprep.subr.mxu0 0.0
    %263 = vmatpush1.xpose.msra.mxu0 0.0
    %264 = vmatprep.subr.mxu0 0.0
    %265 = vmatpush1.xpose.msra.mxu0 0.0
    %266 = vmatprep.subr.mxu0 0.0
    %267 = vmatpush1.xpose.msra.mxu0 0.0
    %268 = vmatprep.mubr.f32.mxu0 0.0
    %269 = vmatmul.mubr.f32.gmra.mrb[0].mxu0 %v202
    %v270 = vpop.f32.mrb[0].mxu0
    %v271 = vadd.f32 0.0, %v270
    %v272 = vpop.f32.mrb[0].mxu0
    %273 = vdwg.mxu0
    %v274 = vmul.f32 %v197, %v271
    %v275 = vadd.f32 %v274, 0.0
    %v277 = vsel %vm116, %v111, 0
    %279 = vmatprep.subr.mxu0 0.0
    %280 = vmatpush1.xpose.msra.mxu0 %v277
    %281 = vmatprep.subr.mxu0 0.0
    %282 = vmatpush1.xpose.msra.mxu0 0.0
    %283 = vmatprep.subr.mxu0 0.0
    %284 = vmatpush1.xpose.msra.mxu0 0.0
    %285 = vmatprep.subr.mxu0 0.0
    %286 = vmatpush1.xpose.msra.mxu0 0.0
    %287 = vmatprep.subr.mxu0 0.0
    %288 = vmatpush1.xpose.msra.mxu0 0.0
    %289 = vmatprep.subr.mxu0 0.0
    %290 = vmatpush1.xpose.msra.mxu0 0.0
    %291 = vmatprep.subr.mxu0 0.0
    %292 = vmatpush1.xpose.msra.mxu0 0.0
    %293 = vmatprep.subr.mxu0 0.0
    %294 = vmatpush1.xpose.msra.mxu0 0.0
    %295 = vmatprep.subr.mxu0 0.0
    %296 = vmatpush1.xpose.msra.mxu0 0.0
    %297 = vmatprep.subr.mxu0 0.0
    %298 = vmatpush1.xpose.msra.mxu0 0.0
    %299 = vmatprep.subr.mxu0 0.0
    %300 = vmatpush1.xpose.msra.mxu0 0.0
    %301 = vmatprep.subr.mxu0 0.0
    %302 = vmatpush1.xpose.msra.mxu0 0.0
    %303 = vmatprep.subr.mxu0 0.0
    %304 = vmatpush1.xpose.msra.mxu0 0.0
    %305 = vmatprep.subr.mxu0 0.0
    %306 = vmatpush1.xpose.msra.mxu0 0.0
    %307 = vmatprep.subr.mxu0 0.0
    %308 = vmatpush1.xpose.msra.mxu0 0.0
    %309 = vmatprep.subr.mxu0 0.0
    %310 = vmatpush1.xpose.msra.mxu0 0.0
    %311 = vmatprep.subr.mxu0 0.0
    %312 = vmatpush1.xpose.msra.mxu0 0.0
    %313 = vmatprep.subr.mxu0 0.0
    %314 = vmatpush1.xpose.msra.mxu0 0.0
    %315 = vmatprep.subr.mxu0 0.0
    %316 = vmatpush1.xpose.msra.mxu0 0.0
    %317 = vmatprep.subr.mxu0 0.0
    %318 = vmatpush1.xpose.msra.mxu0 0.0
    %319 = vmatprep.subr.mxu0 0.0
    %320 = vmatpush1.xpose.msra.mxu0 0.0
    %321 = vmatprep.subr.mxu0 0.0
    %322 = vmatpush1.xpose.msra.mxu0 0.0
    %323 = vmatprep.subr.mxu0 0.0
    %324 = vmatpush1.xpose.msra.mxu0 0.0
    %325 = vmatprep.subr.mxu0 0.0
    %326 = vmatpush1.xpose.msra.mxu0 0.0
    %327 = vmatprep.subr.mxu0 0.0
    %328 = vmatpush1.xpose.msra.mxu0 0.0
    %329 = vmatprep.subr.mxu0 0.0
    %330 = vmatpush1.xpose.msra.mxu0 0.0
    %331 = vmatprep.subr.mxu0 0.0
    %332 = vmatpush1.xpose.msra.mxu0 0.0
    %333 = vmatprep.subr.mxu0 0.0
    %334 = vmatpush1.xpose.msra.mxu0 0.0
    %335 = vmatprep.subr.mxu0 0.0
    %336 = vmatpush1.xpose.msra.mxu0 0.0
    %337 = vmatprep.subr.mxu0 0.0
    %338 = vmatpush1.xpose.msra.mxu0 0.0
    %339 = vmatprep.subr.mxu0 0.0
    %340 = vmatpush1.xpose.msra.mxu0 0.0
    %341 = vmatprep.subr.mxu0 0.0
    %342 = vmatpush1.xpose.msra.mxu0 0.0
    %343 = vmatprep.mubr.f32.mxu0 0.0
    %344 = vmatmul.mubr.f32.gmra.mrb[0].mxu0 %v277
    %v345 = vpop.f32.mrb[0].mxu0
    %v346 = vadd.f32 0.0, %v345
    %v347 = vpop.f32.mrb[0].mxu0
    %348 = vdwg.mxu0
    %v350 = vsel %vm200, %v126, 0
    %352 = vmatprep.subr.mxu0 0.0
    %353 = vmatpush1.xpose.msra.mxu0 %v350
    %354 = vmatprep.subr.mxu0 0.0
    %355 = vmatpush1.xpose.msra.mxu0 0.0
    %356 = vmatprep.subr.mxu0 0.0
    %357 = vmatpush1.xpose.msra.mxu0 0.0
    %358 = vmatprep.subr.mxu0 0.0
    %359 = vmatpush1.xpose.msra.mxu0 0.0
    %360 = vmatprep.subr.mxu0 0.0
    %361 = vmatpush1.xpose.msra.mxu0 0.0
    %362 = vmatprep.subr.mxu0 0.0
    %363 = vmatpush1.xpose.msra.mxu0 0.0
    %364 = vmatprep.subr.mxu0 0.0
    %365 = vmatpush1.xpose.msra.mxu0 0.0
    %366 = vmatprep.subr.mxu0 0.0
    %367 = vmatpush1.xpose.msra.mxu0 0.0
    %368 = vmatprep.subr.mxu0 0.0
    %369 = vmatpush1.xpose.msra.mxu0 0.0
    %370 = vmatprep.subr.mxu0 0.0
    %371 = vmatpush1.xpose.msra.mxu0 0.0
    %372 = vmatprep.subr.mxu0 0.0
    %373 = vmatpush1.xpose.msra.mxu0 0.0
    %374 = vmatprep.subr.mxu0 0.0
    %375 = vmatpush1.xpose.msra.mxu0 0.0
    %376 = vmatprep.subr.mxu0 0.0
    %377 = vmatpush1.xpose.msra.mxu0 0.0
    %378 = vmatprep.subr.mxu0 0.0
    %379 = vmatpush1.xpose.msra.mxu0 0.0
    %380 = vmatprep.subr.mxu0 0.0
    %381 = vmatpush1.xpose.msra.mxu0 0.0
    %382 = vmatprep.subr.mxu0 0.0
    %383 = vmatpush1.xpose.msra.mxu0 0.0
    %384 = vmatprep.subr.mxu0 0.0
    %385 = vmatpush1.xpose.msra.mxu0 0.0
    %386 = vmatprep.subr.mxu0 0.0
    %387 = vmatpush1.xpose.msra.mxu0 0.0
    %388 = vmatprep.subr.mxu0 0.0
    %389 = vmatpush1.xpose.msra.mxu0 0.0
    %390 = vmatprep.subr.mxu0 0.0
    %391 = vmatpush1.xpose.msra.mxu0 0.0
    %392 = vmatprep.subr.mxu0 0.0
    %393 = vmatpush1.xpose.msra.mxu0 0.0
    %394 = vmatprep.subr.mxu0 0.0
    %395 = vmatpush1.xpose.msra.mxu0 0.0
    %396 = vmatprep.subr.mxu0 0.0
    %397 = vmatpush1.xpose.msra.mxu0 0.0
    %398 = vmatprep.subr.mxu0 0.0
    %399 = vmatpush1.xpose.msra.mxu0 0.0
    %400 = vmatprep.subr.mxu0 0.0
    %401 = vmatpush1.xpose.msra.mxu0 0.0
    %402 = vmatprep.subr.mxu0 0.0
    %403 = vmatpush1.xpose.msra.mxu0 0.0
    %404 = vmatprep.subr.mxu0 0.0
    %405 = vmatpush1.xpose.msra.mxu0 0.0
    %406 = vmatprep.subr.mxu0 0.0
    %407 = vmatpush1.xpose.msra.mxu0 0.0
    %408 = vmatprep.subr.mxu0 0.0
    %409 = vmatpush1.xpose.msra.mxu0 0.0
    %410 = vmatprep.subr.mxu0 0.0
    %411 = vmatpush1.xpose.msra.mxu0 0.0
    %412 = vmatprep.subr.mxu0 0.0
    %413 = vmatpush1.xpose.msra.mxu0 0.0
    %414 = vmatprep.subr.mxu0 0.0
    %415 = vmatpush1.xpose.msra.mxu0 0.0
    %416 = vmatprep.mubr.f32.mxu0 0.0
    %417 = vmatmul.mubr.f32.gmra.mrb[0].mxu0 %v350
    %v418 = vpop.f32.mrb[0].mxu0
    %v419 = vadd.f32 0.0, %v418
    %v420 = vpop.f32.mrb[0].mxu0
    %421 = vdwg.mxu0
    %v422 = vmul.f32 %v346, %v419
    %v423 = vadd.f32 %v275, %v422
    %v424 = vmul.f32 %v423, 0.5
    %vm425 = vcmask 64512
    %426 = vst.msk [vmem:[#allocation2] sm:$0xff] %vm425, %v424
    // Predicated region
    $region14: #{simlearner_forward.1} parent=1 // pred_check
      _
    $region15: #{simlearner_forward.1} parent=1 // pred_check_branch
      %428 = sbr.rel (0) target = $region17
    $region16: #{simlearner_forward.1} parent=1 // pred_region
      %s430 = ssub.s32 128, 128
      %431 = vsyncadd [#allocation3], %s430
      %s433 = sshll.u32 [#allocation2], 4
      %s434 = int_to_ptr.vmem [resolvable:$true] %s433
      %436 = dma.vmem_to_hbm [thread:$0]  %s434, 128, %s3, [#allocation3]
    $region17: #{simlearner_forward.1} parent=1 // pred_fallthru
      _
    // Predicated region
    $region18: #{simlearner_forward.1} parent=1 // pred_check
      _
    $region19: #{simlearner_forward.1} parent=1 // pred_check_branch
      %438 = sbr.rel (0) target = $region21
    $region20: #{simlearner_forward.1} parent=1 // pred_region
      %439 = dma.done [#allocation3], 128
    $region21: #{simlearner_forward.1} parent=1 // pred_fallthru
      _
    %440 = vsyncpa [#allocation3], 1

</llo_original>
